<compile_context>
chip_gen: v7x
topology: tpu7x:2x2x1
jax: 0.10.0
libtpu: 0.0.40
codegen_flags: <defaults>
</compile_context>

<pallas_src>
import functools

import jax
import jax.numpy as jnp
from jax.experimental import pallas as pl
from jax.experimental.pallas import tpu as pltpu


def _round_up(a, m):
    return ((a + m - 1) // m) * m


def _global_attention_kernel(filters_size, f_pad,
                             x_ref, w_att_ref, b_att_ref, w_all_ref, b_all_ref,
                             o_ref):
    tb, s, e = x_ref.shape
    x = x_ref[...]                                    # (TB, S, E) f32

    # Fused conv: one MXU pass of the (ungated) rows against the concatenated
    # shift-slices of every filter bank:  (TB*S, E) @ (E, n_shift*Fp).
    # Gating commutes with the conv (per-row scalar), so it is applied later.
    x_flat = x.reshape(tb * s, e).astype(jnp.bfloat16)
    y = jnp.dot(x_flat, w_all_ref[...],
                preferred_element_type=jnp.float32)   # (TB*S, n_shift*Fp)
    y3 = y.reshape(tb, s, -1)                         # (TB, S, n_shift*Fp)

    # Attention score: per-batch-row <x, w_att> + b, then sigmoid.
    # (tiny VPU mul + lane/sublane reduces + EUP sigmoid; overlaps the MXU dot)
    per = x * w_att_ref[...][None, :, :]              # (TB, S, E)
    s_lane = jnp.sum(per, axis=2, keepdims=True)      # (TB, S, 1)
    s_tot = jnp.sum(s_lane, axis=1, keepdims=True)    # (TB, 1, 1)
    score = jax.nn.sigmoid(s_tot + b_att_ref[0, 0])   # (TB, 1, 1)

    # Per filter size: shift-add the per-row partial products (VPU), fold the
    # score into the epilogue, add bias, tanh, max-pool over the valid time
    # axis, and write a lane-dense output slab.
    off = 0
    for j, k in enumerate(filters_size):
        t = s - k + 1                                 # valid conv output length
        c0 = off * f_pad
        acc = y3[:, 0:t, c0:c0 + f_pad]               # (TB, T, Fp)
        for i in range(1, k):
            ci = (off + i) * f_pad
            acc = acc + y3[:, i:i + t, ci:ci + f_pad]
        off += k
        bias = b_all_ref[0:1, j * f_pad:(j + 1) * f_pad]    # (1, Fp)
        act = jnp.tanh(acc * score + bias[:, None, :])      # (TB, T, Fp)
        o_ref[:, j * f_pad:(j + 1) * f_pad] = jnp.max(act, axis=1)


def global_attention_forward(x, params, filters_size=(2, 3, 4),
                             batch_tile=128):
    """Returns a list of (B, filters_num) arrays, one per filter size."""
    B, S, E = x.shape
    nk = len(filters_size)
    F_ = params[f"w{filters_size[0]}"].shape[0]
    Fp = _round_up(F_, 128)                           # lane-dense filter width
    n_shift = sum(filters_size)

    # Batch tiling: grid over batch tiles, pad B so the grid covers exactly.
    TB = min(batch_tile, _round_up(B, 8))
    B_pad = _round_up(B, TB)
    x_pad = x.astype(jnp.float32)
    if B_pad != B:
        x_pad = jnp.pad(x_pad, ((0, B_pad - B), (0, 0), (0, 0)))

    w_att = params["w_att"].astype(jnp.float32)                # (S, E)
    b_att = params["b_att"].reshape(1, 1).astype(jnp.float32)  # (1, 1)

    # Wrapper-side layout plumbing (zero runtime cost in the kernel):
    #  (F, k, E) -> (k, E, Fp) lane-dense slabs, all shifts of all filter sizes
    #  concatenated on the lane axis, cast to bf16 for the MXU.
    w_slabs, b_slabs = [], []
    for k in filters_size:
        W = jnp.transpose(params[f"w{k}"], (1, 2, 0))           # (k, E, F)
        W = jnp.pad(W, ((0, 0), (0, 0), (0, Fp - F_)))          # (k, E, Fp)
        for i in range(k):
            w_slabs.append(W[i])                                # (E, Fp)
        b_slabs.append(jnp.pad(params[f"b{k}"], (0, Fp - F_)))
    w_all = jnp.concatenate(w_slabs, axis=1).astype(jnp.bfloat16)  # (E, n_shift*Fp)
    b_all = jnp.concatenate(b_slabs)[None, :].astype(jnp.float32)  # (1, nk*Fp)

    kernel = functools.partial(_global_attention_kernel,
                               tuple(filters_size), Fp)

    out = pl.pallas_call(
        kernel,
        grid=(B_pad // TB,),
        in_specs=[
            pl.BlockSpec((TB, S, E), lambda b: (b, 0, 0)),          # x tile
            pl.BlockSpec((S, E), lambda b: (0, 0)),                  # w_att
            pl.BlockSpec((1, 1), lambda b: (0, 0)),                  # b_att
            pl.BlockSpec((E, n_shift * Fp), lambda b: (0, 0)),       # fused W
            pl.BlockSpec((1, nk * Fp), lambda b: (0, 0)),            # fused b
        ],
        out_specs=pl.BlockSpec((TB, nk * Fp), lambda b: (b, 0)),
        out_shape=jax.ShapeDtypeStruct((B_pad, nk * Fp), jnp.float32),
        compiler_params=pltpu.CompilerParams(
            dimension_semantics=("parallel",),       # batch tiles independent
            vmem_limit_bytes=48 * 1024 * 1024),
    )(x_pad, w_att, b_att, w_all, b_all)

    # Un-pad: drop padded batch rows and padded filter lanes.
    return [out[:B, j * Fp:j * Fp + F_] for j in range(nk)]


def init_params(key, seq_len, emb_size, filters_size=(2, 3, 4),
                filters_num=100):
    keys = jax.random.split(key, 2 + 2 * len(filters_size))
    params = {
        "w_att": 0.05 * jax.random.normal(keys[0], (seq_len, emb_size),
                                          jnp.float32),
        "b_att": 0.05 * jax.random.normal(keys[1], (), jnp.float32),
    }
    for idx, k in enumerate(filters_size):
        params[f"w{k}"] = 0.05 * jax.random.normal(
            keys[2 + 2 * idx], (filters_num, k, emb_size), jnp.float32)
        params[f"b{k}"] = 0.05 * jax.random.normal(
            keys[3 + 2 * idx], (filters_num,), jnp.float32)
    return params


def global_attention_reference(x, params, filters_size=(2, 3, 4)):
    """Pure-JAX f32 reference mirroring the PyTorch forward exactly."""
    B, S, E = x.shape
    score = jax.nn.sigmoid(
        jnp.einsum("bse,se->b", x, params["w_att"]) + params["b_att"])
    xs = x * score[:, None, None]
    outs = []
    for k in filters_size:
        W = params[f"w{k}"]                       # (F, k, E)
        bvec = params[f"b{k}"]                    # (F,)
        T = S - k + 1
        windows = jnp.stack([xs[:, t:t + k, :] for t in range(T)],
                            axis=1)               # (B, T, k, E)
        conv = jnp.einsum("btke,fke->btf", windows, W) + bvec[None, None, :]
        act = jnp.tanh(conv)
        outs.append(jnp.max(act, axis=1))         # (B, F)
    return outs


if __name__ == "__main__":
    B, S, E = 2, 8, 32
    filters_size = (2, 3, 4)
    filters_num = 100

    key = jax.random.PRNGKey(0)
    kx, kp = jax.random.split(key)
    x = jax.random.normal(kx, (B, S, E), jnp.float32)
    params = init_params(kp, S, E, filters_size, filters_num)

    outs = global_attention_forward(x, params, filters_size)
    outs = [jax.block_until_ready(o) for o in outs]

    refs = global_attention_reference(x, params, filters_size)
    for o, r in zip(outs, refs):
        assert o.shape == (B, filters_num)
        # bf16 MXU operands -> slightly looser tolerance than pure f32.
        assert jnp.allclose(o, r, atol=2e-2, rtol=2e-2), \
            f"max err {jnp.max(jnp.abs(o - r))}"

    print("KERNEL_OK")
</pallas_src>

<mosaic_0001>
module attributes {stable_mosaic.version = 11 : i64} {
  func.func @_global_attention_kernel(%arg0: i32, %arg1: memref<8x8x32xf32, #tpu.memory_space<vmem>>, %arg2: memref<8x32xf32, #tpu.memory_space<vmem>>, %arg3: memref<1x1xf32, #tpu.memory_space<vmem>>, %arg4: memref<32x1152xbf16, #tpu.memory_space<vmem>>, %arg5: memref<1x384xf32, #tpu.memory_space<vmem>>, %arg6: memref<8x384xf32, #tpu.memory_space<vmem>>) attributes {dimension_semantics = [#tpu.dimension_semantics<parallel>], iteration_bounds = array<i64: 1>, scalar_prefetch = 0 : i64, scratch_operands = 0 : i64, tpu.core_type = #tpu.core_type<tc>, window_params = [{transform_indices = @transform_0, window_bounds = array<i64: 8, 8, 32>}, {pipeline_mode = #tpu.pipeline_mode<synchronous>, transform_indices = @transform_1, window_bounds = array<i64: 8, 32>}, {pipeline_mode = #tpu.pipeline_mode<synchronous>, transform_indices = @transform_2, window_bounds = array<i64: 1, 1>}, {pipeline_mode = #tpu.pipeline_mode<synchronous>, transform_indices = @transform_3, window_bounds = array<i64: 32, 1152>}, {pipeline_mode = #tpu.pipeline_mode<synchronous>, transform_indices = @transform_4, window_bounds = array<i64: 1, 384>}, {transform_indices = @transform_5, window_bounds = array<i64: 8, 384>}]} {
    %c0 = arith.constant 0 : index
    %c0_0 = arith.constant 0 : index
    %c0_1 = arith.constant 0 : index
    %0 = vector.load %arg1[%c0, %c0_0, %c0_1] : memref<8x8x32xf32, #tpu.memory_space<vmem>>, vector<8x8x32xf32>
    %1 = vector.shape_cast %0 : vector<8x8x32xf32> to vector<64x32xf32>
    %2 = arith.truncf %1 : vector<64x32xf32> to vector<64x32xbf16>
    %c0_2 = arith.constant 0 : index
    %c0_3 = arith.constant 0 : index
    %3 = vector.load %arg4[%c0_2, %c0_3] : memref<32x1152xbf16, #tpu.memory_space<vmem>>, vector<32x1152xbf16>
    %cst = arith.constant dense<0.000000e+00> : vector<64x1152xf32>
    %4 = tpu.matmul %2, %3, %cst {dimension_numbers = #tpu.dot_dimension_numbers<[1], [0], [0], [1], [0, 0, 1, 1], [], []>} : vector<64x32xbf16>, vector<32x1152xbf16>, vector<64x1152xf32> -> vector<64x1152xf32>
    %5 = vector.shape_cast %4 : vector<64x1152xf32> to vector<8x8x1152xf32>
    %c0_4 = arith.constant 0 : index
    %c0_5 = arith.constant 0 : index
    %6 = vector.load %arg2[%c0_4, %c0_5] : memref<8x32xf32, #tpu.memory_space<vmem>>, vector<8x32xf32>
    %7 = vector.shape_cast %6 : vector<8x32xf32> to vector<1x8x32xf32>
    %8 = vector.broadcast %7 : vector<1x8x32xf32> to vector<8x8x32xf32>
    %9 = arith.mulf %0, %8 : vector<8x8x32xf32>
    %cst_6 = arith.constant dense<0.000000e+00> : vector<8x8xf32>
    %10 = vector.multi_reduction <add>, %9, %cst_6 [2] : vector<8x8x32xf32> to vector<8x8xf32>
    %11 = vector.shape_cast %10 : vector<8x8xf32> to vector<8x8x1xf32>
    %cst_7 = arith.constant dense<0.000000e+00> : vector<8x1xf32>
    %12 = vector.multi_reduction <add>, %11, %cst_7 [1] : vector<8x8x1xf32> to vector<8x1xf32>
    %13 = vector.shape_cast %12 : vector<8x1xf32> to vector<8x1x1xf32>
    %c0_8 = arith.constant 0 : index
    %c0_9 = arith.constant 0 : index
    %14 = vector.load %arg3[%c0_8, %c0_9] : memref<1x1xf32, #tpu.memory_space<vmem>>, vector<1x1xf32>
    %15 = vector.extract %14[0, 0] : f32 from vector<1x1xf32>
    %16 = vector.broadcast %15 : f32 to vector<8x1x1xf32>
    %17 = arith.addf %13, %16 : vector<8x1x1xf32>
    %18 = arith.negf %17 : vector<8x1x1xf32>
    %19 = math.exp %18 : vector<8x1x1xf32>
    %cst_10 = arith.constant 1.000000e+00 : f32
    %20 = vector.broadcast %cst_10 : f32 to vector<8x1x1xf32>
    %21 = arith.addf %20, %19 : vector<8x1x1xf32>
    %22 = arith.divf %20, %21 : vector<8x1x1xf32>
    %23 = vector.extract_strided_slice %5 {offsets = [0, 0, 0], sizes = [8, 7, 128], strides = [1, 1, 1]} : vector<8x8x1152xf32> to vector<8x7x128xf32>
    %24 = vector.extract_strided_slice %5 {offsets = [0, 1, 128], sizes = [8, 7, 128], strides = [1, 1, 1]} : vector<8x8x1152xf32> to vector<8x7x128xf32>
    %25 = arith.addf %23, %24 : vector<8x7x128xf32>
    %c0_11 = arith.constant 0 : index
    %c0_12 = arith.constant 0 : index
    %26 = vector.load %arg5[%c0_11, %c0_12] : memref<1x384xf32, #tpu.memory_space<vmem>>, vector<1x128xf32>
    %27 = vector.broadcast %22 : vector<8x1x1xf32> to vector<8x7x128xf32>
    %28 = arith.mulf %25, %27 : vector<8x7x128xf32>
    %29 = vector.shape_cast %26 : vector<1x128xf32> to vector<1x1x128xf32>
    %30 = vector.broadcast %29 : vector<1x1x128xf32> to vector<8x7x128xf32>
    %31 = arith.addf %28, %30 : vector<8x7x128xf32>
    %32 = math.tanh %31 : vector<8x7x128xf32>
    %cst_13 = arith.constant dense<0xFF800000> : vector<8x128xf32>
    %33 = vector.multi_reduction <maximumf>, %32, %cst_13 [1] : vector<8x7x128xf32> to vector<8x128xf32>
    %c0_14 = arith.constant 0 : index
    %c0_15 = arith.constant 0 : index
    %34 = vector.load %arg6[%c0_14, %c0_15] : memref<8x384xf32, #tpu.memory_space<vmem>>, vector<8x128xf32>
    tpu.vector_store %arg6[%c0_14, %c0_15], %33 {strides = array<i32>} : memref<8x384xf32, #tpu.memory_space<vmem>>, vector<8x128xf32>,
    %35 = vector.extract_strided_slice %5 {offsets = [0, 0, 256], sizes = [8, 6, 128], strides = [1, 1, 1]} : vector<8x8x1152xf32> to vector<8x6x128xf32>
    %36 = vector.extract_strided_slice %5 {offsets = [0, 1, 384], sizes = [8, 6, 128], strides = [1, 1, 1]} : vector<8x8x1152xf32> to vector<8x6x128xf32>
    %37 = arith.addf %35, %36 : vector<8x6x128xf32>
    %38 = vector.extract_strided_slice %5 {offsets = [0, 2, 512], sizes = [8, 6, 128], strides = [1, 1, 1]} : vector<8x8x1152xf32> to vector<8x6x128xf32>
    %39 = arith.addf %37, %38 : vector<8x6x128xf32>
    %c0_16 = arith.constant 0 : index
    %c128 = arith.constant 128 : index
    %40 = vector.load %arg5[%c0_16, %c128] : memref<1x384xf32, #tpu.memory_space<vmem>>, vector<1x128xf32>
    %41 = vector.broadcast %22 : vector<8x1x1xf32> to vector<8x6x128xf32>
    %42 = arith.mulf %39, %41 : vector<8x6x128xf32>
    %43 = vector.shape_cast %40 : vector<1x128xf32> to vector<1x1x128xf32>
    %44 = vector.broadcast %43 : vector<1x1x128xf32> to vector<8x6x128xf32>
    %45 = arith.addf %42, %44 : vector<8x6x128xf32>
    %46 = math.tanh %45 : vector<8x6x128xf32>
    %cst_17 = arith.constant dense<0xFF800000> : vector<8x128xf32>
    %47 = vector.multi_reduction <maximumf>, %46, %cst_17 [1] : vector<8x6x128xf32> to vector<8x128xf32>
    %c0_18 = arith.constant 0 : index
    %c128_19 = arith.constant 128 : index
    %48 = vector.load %arg6[%c0_18, %c128_19] : memref<8x384xf32, #tpu.memory_space<vmem>>, vector<8x128xf32>
    tpu.vector_store %arg6[%c0_18, %c128_19], %47 {strides = array<i32>} : memref<8x384xf32, #tpu.memory_space<vmem>>, vector<8x128xf32>,
    %49 = vector.extract_strided_slice %5 {offsets = [0, 0, 640], sizes = [8, 5, 128], strides = [1, 1, 1]} : vector<8x8x1152xf32> to vector<8x5x128xf32>
    %50 = vector.extract_strided_slice %5 {offsets = [0, 1, 768], sizes = [8, 5, 128], strides = [1, 1, 1]} : vector<8x8x1152xf32> to vector<8x5x128xf32>
    %51 = arith.addf %49, %50 : vector<8x5x128xf32>
    %52 = vector.extract_strided_slice %5 {offsets = [0, 2, 896], sizes = [8, 5, 128], strides = [1, 1, 1]} : vector<8x8x1152xf32> to vector<8x5x128xf32>
    %53 = arith.addf %51, %52 : vector<8x5x128xf32>
    %54 = vector.extract_strided_slice %5 {offsets = [0, 3, 1024], sizes = [8, 5, 128], strides = [1, 1, 1]} : vector<8x8x1152xf32> to vector<8x5x128xf32>
    %55 = arith.addf %53, %54 : vector<8x5x128xf32>
    %c0_20 = arith.constant 0 : index
    %c256 = arith.constant 256 : index
    %56 = vector.load %arg5[%c0_20, %c256] : memref<1x384xf32, #tpu.memory_space<vmem>>, vector<1x128xf32>
    %57 = vector.broadcast %22 : vector<8x1x1xf32> to vector<8x5x128xf32>
    %58 = arith.mulf %55, %57 : vector<8x5x128xf32>
    %59 = vector.shape_cast %56 : vector<1x128xf32> to vector<1x1x128xf32>
    %60 = vector.broadcast %59 : vector<1x1x128xf32> to vector<8x5x128xf32>
    %61 = arith.addf %58, %60 : vector<8x5x128xf32>
    %62 = math.tanh %61 : vector<8x5x128xf32>
    %cst_21 = arith.constant dense<0xFF800000> : vector<8x128xf32>
    %63 = vector.multi_reduction <maximumf>, %62, %cst_21 [1] : vector<8x5x128xf32> to vector<8x128xf32>
    %c0_22 = arith.constant 0 : index
    %c256_23 = arith.constant 256 : index
    %64 = vector.load %arg6[%c0_22, %c256_23] : memref<8x384xf32, #tpu.memory_space<vmem>>, vector<8x128xf32>
    tpu.vector_store %arg6[%c0_22, %c256_23], %63 {strides = array<i32>} : memref<8x384xf32, #tpu.memory_space<vmem>>, vector<8x128xf32>,
    return
  }
  func.func @transform_0(%arg0: i32) -> (i32, i32, i32) {
    %c0_i32 = arith.constant 0 : i32
    %c0_i32_0 = arith.constant 0 : i32
    %c0_i32_1 = arith.constant 0 : i32
    return %arg0, %c0_i32, %c0_i32_0 : i32, i32, i32
  }
  func.func @transform_1(%arg0: i32) -> (i32, i32) {
    %c0_i32 = arith.constant 0 : i32
    %c0_i32_0 = arith.constant 0 : i32
    %c0_i32_1 = arith.constant 0 : i32
    return %c0_i32, %c0_i32_0 : i32, i32
  }
  func.func @transform_2(%arg0: i32) -> (i32, i32) {
    %c0_i32 = arith.constant 0 : i32
    %c0_i32_0 = arith.constant 0 : i32
    %c0_i32_1 = arith.constant 0 : i32
    return %c0_i32, %c0_i32_0 : i32, i32
  }
  func.func @transform_3(%arg0: i32) -> (i32, i32) {
    %c0_i32 = arith.constant 0 : i32
    %c0_i32_0 = arith.constant 0 : i32
    %c0_i32_1 = arith.constant 0 : i32
    return %c0_i32, %c0_i32_0 : i32, i32
  }
  func.func @transform_4(%arg0: i32) -> (i32, i32) {
    %c0_i32 = arith.constant 0 : i32
    %c0_i32_0 = arith.constant 0 : i32
    %c0_i32_1 = arith.constant 0 : i32
    return %c0_i32, %c0_i32_0 : i32, i32
  }
  func.func @transform_5(%arg0: i32) -> (i32, i32) {
    %c0_i32 = arith.constant 0 : i32
    %c0_i32_0 = arith.constant 0 : i32
    return %arg0, %c0_i32 : i32, i32
  }
}

</mosaic_0001>

<llo_original>
// kernel: tpu_custom_call.1
$region0: #{tpu_custom_call.1}
  #allocation0 [shape = 'u32[]', space=smem, size = 0x4, offset = 0x4, fixed_abs, tag = 'smem constant byte address 0x4 - core index']
  #allocation1 [shape = 'u32[144,128]{1,0:T(1,128)}', space=vmem, size = 0x12000, scoped, tag = 'internal scratch']
  #allocation2 [shape = 'f32[1,1]{1,0:T(1,128)S(1)}', space=vmem, size = 0x200, scoped, tag = 'scoped memory for tpu_custom_call.1']
  %s0 = inlined_call_operand.hbm [shape: f32[8,8,32], index: 0, kind: input, shape index: {}]
  %s1 = inlined_call_operand.hbm [shape: f32[8,32], index: 1, kind: input, shape index: {}]
  %s2 = inlined_call_operand.<no memory space> [shape: f32[1,1], index: 2, kind: input, shape index: {}]
  %s3 = inlined_call_operand.hbm [shape: bf16[32,1152], index: 3, kind: input, shape index: {}]
  %s4 = inlined_call_operand.vmem [shape: f32[1,384], index: 4, kind: input, shape index: {}]
  %s5 = inlined_call_operand.hbm [shape: f32[8,384], index: 5, kind: output, shape index: {}]
  %s6 = sld [smem:[#allocation0]]
  $region42: #{tpu_custom_call.1} parent=0
    _
  %s8 = ssub.s32 1, %s6
  %s9 = scalar_select 0, %s8, %s6
  %v10 = vstv %s2
  %11 = vst [vmem:[#allocation2] sm:$0x1] %v10
  $region1: #{tpu_custom_call.1} parent=0
    #allocation3 [shape = 'u8[32768]{0}', space=vmem, size = 0x8000, scoped, tag = 'input window, operand 0, single buffered']
    #allocation4 [shape = 's32[1]{0}', space=sflag, size = 0x4, scoped, tag = 'scoped memory for tpu_custom_call.1']
    #allocation5 [shape = 's32[1]{0}', space=sflag, size = 0x4, scoped, tag = 'scoped memory for tpu_custom_call.1']
    #allocation6 [shape = 'u8[4096]{0}', space=vmem, size = 0x1000, scoped, tag = 'input window, operand 1, single buffered']
    #allocation7 [shape = 's32[1]{0}', space=sflag, size = 0x4, scoped, tag = 'scoped memory for tpu_custom_call.1']
    #allocation8 [shape = 'u8[73728]{0}', space=vmem, size = 0x12000, scoped, tag = 'input window, operand 3, single buffered']
    #allocation9 [shape = 'u8[12288]{0}', space=vmem, size = 0x3000, scoped, tag = 'output window, operand 0, single buffered']
    %12 = vsyncpa [#allocation4], 0
    %13 = vsyncpa [#allocation7], 0
    %14 = vsyncpa [#allocation5], 0
    // Predicated region
    $region2: #{tpu_custom_call.1} parent=1 // pred_check
      _
    $region3: #{tpu_custom_call.1} parent=1 // pred_check_branch
      %16 = sbr.rel (0) target = $region5
    $region4: #{tpu_custom_call.1} parent=1 // pred_region
      %s18 = ssub.s32 1024, 1024
      %19 = vsyncadd [#allocation4], %s18
      %s20 = sshll.u32 [#allocation3], 4
      %s21 = int_to_ptr.vmem [resolvable:$true] %s20
      %26 = dma.hbm_to_vmem [thread:$0]  %s0, 1024, %s21, [#allocation4], 128, 128, 8
    $region5: #{tpu_custom_call.1} parent=1 // pred_fallthru
      _
    // Predicated region
    $region6: #{tpu_custom_call.1} parent=1 // pred_check
      _
    $region7: #{tpu_custom_call.1} parent=1 // pred_check_branch
      %28 = sbr.rel (0) target = $region9
    $region8: #{tpu_custom_call.1} parent=1 // pred_region
      %s30 = ssub.s32 128, 128
      %31 = vsyncadd [#allocation7], %s30
      %s33 = sshll.u32 [#allocation6], 4
      %s34 = int_to_ptr.vmem [resolvable:$true] %s33
      %36 = dma.hbm_to_vmem [thread:$0]  %s1, 128, %s34, [#allocation7]
    $region9: #{tpu_custom_call.1} parent=1 // pred_fallthru
      _
    // Predicated region
    $region10: #{tpu_custom_call.1} parent=1 // pred_check
      _
    $region11: #{tpu_custom_call.1} parent=1 // pred_check_branch
      %38 = sbr.rel (0) target = $region13
    $region12: #{tpu_custom_call.1} parent=1 // pred_region
      _
    $region13: #{tpu_custom_call.1} parent=1 // pred_fallthru
      _
    // Predicated region
    $region14: #{tpu_custom_call.1} parent=1 // pred_check
      _
    $region15: #{tpu_custom_call.1} parent=1 // pred_check_branch
      %40 = sbr.rel (0) target = $region17
    $region16: #{tpu_custom_call.1} parent=1 // pred_region
      %s42 = ssub.s32 2304, 2304
      %43 = vsyncadd [#allocation7], %s42
      %s44 = sshll.u32 [#allocation8], 4
      %s45 = int_to_ptr.vmem [resolvable:$true] %s44
      %50 = dma.hbm_to_vmem [thread:$0]  %s3, 2304, %s45, [#allocation7], 576, 576, 36
    $region17: #{tpu_custom_call.1} parent=1 // pred_fallthru
      _
    // Predicated region
    $region18: #{tpu_custom_call.1} parent=1 // pred_check
      _
    $region19: #{tpu_custom_call.1} parent=1 // pred_check_branch
      %52 = sbr.rel (0) target = $region21
    $region20: #{tpu_custom_call.1} parent=1 // pred_region
      _
    $region21: #{tpu_custom_call.1} parent=1 // pred_fallthru
      _
    // Predicated region
    $region22: #{tpu_custom_call.1} parent=1 // pred_check
      _
    $region23: #{tpu_custom_call.1} parent=1 // pred_check_branch
      %54 = sbr.rel (0) target = $region25
    $region24: #{tpu_custom_call.1} parent=1 // pred_region
      %55 = dma.done [#allocation4], 1024
    $region25: #{tpu_custom_call.1} parent=1 // pred_fallthru
      _
    // Predicated region
    $region26: #{tpu_custom_call.1} parent=1 // pred_check
      _
    $region27: #{tpu_custom_call.1} parent=1 // pred_check_branch
      %57 = sbr.rel (0) target = $region29
    $region28: #{tpu_custom_call.1} parent=1 // pred_region
      %58 = dma.done [#allocation7], 128
    $region29: #{tpu_custom_call.1} parent=1 // pred_fallthru
      _
    // Predicated region
    $region30: #{tpu_custom_call.1} parent=1 // pred_check
      _
    $region31: #{tpu_custom_call.1} parent=1 // pred_check_branch
      %60 = sbr.rel (0) target = $region33
    $region32: #{tpu_custom_call.1} parent=1 // pred_region
      %61 = dma.done [#allocation7], 2304
    $region33: #{tpu_custom_call.1} parent=1 // pred_fallthru
      _
    %v63 = vld [vmem:[#allocation3] sm:$0xff]
    %v64 = vld [vmem:[#allocation3 + $0x8] sm:$0xff]
    %v65 = vld [vmem:[#allocation3 + $0x10] sm:$0xff]
    %v66 = vld [vmem:[#allocation3 + $0x18] sm:$0xff]
    %v67 = vld [vmem:[#allocation3 + $0x20] sm:$0xff]
    %v68 = vld [vmem:[#allocation3 + $0x28] sm:$0xff]
    %v69 = vld [vmem:[#allocation3 + $0x30] sm:$0xff]
    %v70 = vld [vmem:[#allocation3 + $0x38] sm:$0xff]
    %v71 = vpack.c.bf16 %v64, %v63
    %v72 = vpack.c.bf16 %v66, %v65
    %v73 = vpack.c.bf16 %v68, %v67
    %v74 = vpack.c.bf16 %v70, %v69
    %v75 = vld [vmem:[#allocation8] sm:$0xff]
    %v76 = vld [vmem:[#allocation8 + $0x8] sm:$0xff]
    %v77 = vld [vmem:[#allocation8 + $0x10] sm:$0xff]
    %v78 = vld [vmem:[#allocation8 + $0x18] sm:$0xff]
    %v79 = vld [vmem:[#allocation8 + $0x20] sm:$0xf]
    %v80 = vld [vmem:[#allocation8 + $0x24] sm:$0xff]
    %v81 = vld [vmem:[#allocation8 + $0x2c] sm:$0xff]
    %v82 = vld [vmem:[#allocation8 + $0x34] sm:$0xff]
    %v83 = vld [vmem:[#allocation8 + $0x3c] sm:$0xff]
    %v84 = vld [vmem:[#allocation8 + $0x44] sm:$0xf]
    %v85 = vld [vmem:[#allocation8 + $0x48] sm:$0xff]
    %v86 = vld [vmem:[#allocation8 + $0x50] sm:$0xff]
    %v87 = vld [vmem:[#allocation8 + $0x58] sm:$0xff]
    %v88 = vld [vmem:[#allocation8 + $0x60] sm:$0xff]
    %v89 = vld [vmem:[#allocation8 + $0x68] sm:$0xf]
    %v90 = vld [vmem:[#allocation8 + $0x6c] sm:$0xff]
    %v91 = vld [vmem:[#allocation8 + $0x74] sm:$0xff]
    %v92 = vld [vmem:[#allocation8 + $0x7c] sm:$0xff]
    %v93 = vld [vmem:[#allocation8 + $0x84] sm:$0xff]
    %v94 = vld [vmem:[#allocation8 + $0x8c] sm:$0xf]
    %v115 = vunpack.c.l.b16 %v75
    %v116 = vunpack.c.h.b16 %v75
    %v117 = vunpack.c.l.b16 %v76
    %v118 = vunpack.c.h.b16 %v76
    %v119 = vunpack.c.l.b16 %v77
    %v120 = vunpack.c.h.b16 %v77
    %v121 = vunpack.c.l.b16 %v78
    %v122 = vunpack.c.h.b16 %v78
    %v123 = vunpack.c.l.b16 %v79
    %v124 = vunpack.c.l.b16 %v80
    %v125 = vunpack.c.h.b16 %v80
    %v126 = vunpack.c.l.b16 %v81
    %v127 = vunpack.c.h.b16 %v81
    %v128 = vunpack.c.l.b16 %v82
    %v129 = vunpack.c.h.b16 %v82
    %v130 = vunpack.c.l.b16 %v83
    %v131 = vunpack.c.h.b16 %v83
    %v132 = vunpack.c.l.b16 %v84
    %v133 = vunpack.c.l.b16 %v85
    %v134 = vunpack.c.h.b16 %v85
    %v135 = vunpack.c.l.b16 %v86
    %v136 = vunpack.c.h.b16 %v86
    %v137 = vunpack.c.l.b16 %v87
    %v138 = vunpack.c.h.b16 %v87
    %v139 = vunpack.c.l.b16 %v88
    %v140 = vunpack.c.h.b16 %v88
    %v141 = vunpack.c.l.b16 %v89
    %v142 = vunpack.c.l.b16 %v90
    %v143 = vunpack.c.h.b16 %v90
    %v144 = vunpack.c.l.b16 %v91
    %v145 = vunpack.c.h.b16 %v91
    %v146 = vunpack.c.l.b16 %v92
    %v147 = vunpack.c.h.b16 %v92
    %v148 = vunpack.c.l.b16 %v93
    %v149 = vunpack.c.h.b16 %v93
    %v150 = vunpack.c.l.b16 %v94
    %v151 = vpack.c.b16 %v124, %v115
    %v152 = vpack.c.b16 %v125, %v116
    %v153 = vpack.c.b16 %v126, %v117
    %v154 = vpack.c.b16 %v127, %v118
    %v155 = vpack.c.b16 %v128, %v119
    %v156 = vpack.c.b16 %v129, %v120
    %v157 = vpack.c.b16 %v130, %v121
    %v158 = vpack.c.b16 %v131, %v122
    %v159 = vpack.c.b16 %v132, %v123
    %v160 = vpack.c.b16 %v142, %v133
    %v161 = vpack.c.b16 %v143, %v134
    %v162 = vpack.c.b16 %v144, %v135
    %v163 = vpack.c.b16 %v145, %v136
    %v164 = vpack.c.b16 %v146, %v137
    %v165 = vpack.c.b16 %v147, %v138
    %v166 = vpack.c.b16 %v148, %v139
    %v167 = vpack.c.b16 %v149, %v140
    %v168 = vpack.c.b16 %v150, %v141
    %vm187 = vcmask 261120
    %v189 = vsel %vm187, %v71, 0
    %v192 = vsel %vm187, %v72, 0
    %v195 = vsel %vm187, %v73, 0
    %v198 = vsel %vm187, %v74, 0
    %200 = vmatprep.subr.bf16.mxu0 %v152
    %201 = vmatpush1.bf16.msra.mxu0 %v151
    %202 = vmatprep.subr.bf16.mxu0 %v161
    %203 = vmatpush1.bf16.msra.mxu0 %v160
    %204 = vmatprep.subr.bf16.mxu0 0
    %205 = vmatpush1.bf16.msra.mxu0 0
    %206 = vmatprep.subr.bf16.mxu0 0
    %207 = vmatpush1.bf16.msra.mxu0 0
    %208 = vmatprep.subr.bf16.mxu0 0
    %209 = vmatpush1.bf16.msra.mxu0 0
    %210 = vmatprep.subr.bf16.mxu0 0
    %211 = vmatpush1.bf16.msra.mxu0 0
    %212 = vmatprep.subr.bf16.mxu0 0
    %213 = vmatpush1.bf16.msra.mxu0 0
    %214 = vmatprep.subr.bf16.mxu0 0
    %215 = vmatpush1.bf16.msra.mxu0 0
    %216 = vmatprep.subr.bf16.mxu0 0
    %217 = vmatpush1.bf16.msra.mxu0 0
    %218 = vmatprep.subr.bf16.mxu0 0
    %219 = vmatpush1.bf16.msra.mxu0 0
    %220 = vmatprep.subr.bf16.mxu0 0
    %221 = vmatpush1.bf16.msra.mxu0 0
    %222 = vmatprep.subr.bf16.mxu0 0
    %223 = vmatpush1.bf16.msra.mxu0 0
    %224 = vmatprep.subr.bf16.mxu0 0
    %225 = vmatpush1.bf16.msra.mxu0 0
    %226 = vmatprep.subr.bf16.mxu0 0
    %227 = vmatpush1.bf16.msra.mxu0 0
    %228 = vmatprep.subr.bf16.mxu0 0
    %229 = vmatpush1.bf16.msra.mxu0 0
    %230 = vmatprep.subr.bf16.mxu0 0
    %231 = vmatpush1.bf16.msra.mxu0 0
    %232 = vmatprep.mubr.bf16.mxu0 0
    %233 = vmatmul.mubr.bf16.gmra.mrb[0].mxu0 %v189
    %v234 = vpop.f32.mrb[0].mxu0
    %v235 = vadd.f32 0.0, %v234
    %v236 = vpop.f32.mrb[0].mxu0
    %v237 = vadd.f32 0.0, %v236
    %v238 = vpop.f32.mrb[0].mxu0
    %v239 = vadd.f32 0.0, %v238
    %v240 = vpop.f32.mrb[0].mxu0
    %v241 = vadd.f32 0.0, %v240
    %242 = vmatprep.mubr.bf16.mxu0 0
    %243 = vmatmul.mubr.bf16.gmra.mrb[0].mxu0 %v192
    %v244 = vpop.f32.mrb[0].mxu0
    %v245 = vadd.f32 0.0, %v244
    %v246 = vpop.f32.mrb[0].mxu0
    %v247 = vadd.f32 0.0, %v246
    %v248 = vpop.f32.mrb[0].mxu0
    %v249 = vadd.f32 0.0, %v248
    %v250 = vpop.f32.mrb[0].mxu0
    %v251 = vadd.f32 0.0, %v250
    %252 = vmatprep.mubr.bf16.mxu0 0
    %253 = vmatmul.mubr.bf16.gmra.mrb[0].mxu0 %v195
    %v254 = vpop.f32.mrb[0].mxu0
    %v255 = vadd.f32 0.0, %v254
    %v256 = vpop.f32.mrb[0].mxu0
    %v257 = vadd.f32 0.0, %v256
    %v258 = vpop.f32.mrb[0].mxu0
    %v259 = vadd.f32 0.0, %v258
    %v260 = vpop.f32.mrb[0].mxu0
    %v261 = vadd.f32 0.0, %v260
    %262 = vmatprep.mubr.bf16.mxu0 0
    %263 = vmatmul.mubr.bf16.gmra.mrb[0].mxu0 %v198
    %v264 = vpop.f32.mrb[0].mxu0
    %v265 = vadd.f32 0.0, %v264
    %v266 = vpop.f32.mrb[0].mxu0
    %v267 = vadd.f32 0.0, %v266
    %v268 = vpop.f32.mrb[0].mxu0
    %v269 = vadd.f32 0.0, %v268
    %v270 = vpop.f32.mrb[0].mxu0
    %v271 = vadd.f32 0.0, %v270
    %272 = vdwg.mxu0
    %273 = vmatprep.subr.bf16.mxu0 %v154
    %274 = vmatpush1.bf16.msra.mxu0 %v153
    %275 = vmatprep.subr.bf16.mxu0 %v163
    %276 = vmatpush1.bf16.msra.mxu0 %v162
    %277 = vmatprep.subr.bf16.mxu0 0
    %278 = vmatpush1.bf16.msra.mxu0 0
    %279 = vmatprep.subr.bf16.mxu0 0
    %280 = vmatpush1.bf16.msra.mxu0 0
    %281 = vmatprep.subr.bf16.mxu0 0
    %282 = vmatpush1.bf16.msra.mxu0 0
    %283 = vmatprep.subr.bf16.mxu0 0
    %284 = vmatpush1.bf16.msra.mxu0 0
    %285 = vmatprep.subr.bf16.mxu0 0
    %286 = vmatpush1.bf16.msra.mxu0 0
    %287 = vmatprep.subr.bf16.mxu0 0
    %288 = vmatpush1.bf16.msra.mxu0 0
    %289 = vmatprep.subr.bf16.mxu0 0
    %290 = vmatpush1.bf16.msra.mxu0 0
    %291 = vmatprep.subr.bf16.mxu0 0
    %292 = vmatpush1.bf16.msra.mxu0 0
    %293 = vmatprep.subr.bf16.mxu0 0
    %294 = vmatpush1.bf16.msra.mxu0 0
    %295 = vmatprep.subr.bf16.mxu0 0
    %296 = vmatpush1.bf16.msra.mxu0 0
    %297 = vmatprep.subr.bf16.mxu0 0
    %298 = vmatpush1.bf16.msra.mxu0 0
    %299 = vmatprep.subr.bf16.mxu0 0
    %300 = vmatpush1.bf16.msra.mxu0 0
    %301 = vmatprep.subr.bf16.mxu0 0
    %302 = vmatpush1.bf16.msra.mxu0 0
    %303 = vmatprep.subr.bf16.mxu0 0
    %304 = vmatpush1.bf16.msra.mxu0 0
    %305 = vmatprep.mubr.bf16.mxu0 0
    %306 = vmatmul.mubr.bf16.gmra.mrb[0].mxu0 %v189
    %v307 = vpop.f32.mrb[0].mxu0
    %v308 = vadd.f32 0.0, %v307
    %v309 = vpop.f32.mrb[0].mxu0
    %v310 = vadd.f32 0.0, %v309
    %v311 = vpop.f32.mrb[0].mxu0
    %v312 = vadd.f32 0.0, %v311
    %v313 = vpop.f32.mrb[0].mxu0
    %v314 = vadd.f32 0.0, %v313
    %315 = vmatprep.mubr.bf16.mxu0 0
    %316 = vmatmul.mubr.bf16.gmra.mrb[0].mxu0 %v192
    %v317 = vpop.f32.mrb[0].mxu0
    %v318 = vadd.f32 0.0, %v317
    %v319 = vpop.f32.mrb[0].mxu0
    %v320 = vadd.f32 0.0, %v319
    %v321 = vpop.f32.mrb[0].mxu0
    %v322 = vadd.f32 0.0, %v321
    %v323 = vpop.f32.mrb[0].mxu0
    %v324 = vadd.f32 0.0, %v323
    %325 = vmatprep.mubr.bf16.mxu0 0
    %326 = vmatmul.mubr.bf16.gmra.mrb[0].mxu0 %v195
    %v327 = vpop.f32.mrb[0].mxu0
    %v328 = vadd.f32 0.0, %v327
    %v329 = vpop.f32.mrb[0].mxu0
    %v330 = vadd.f32 0.0, %v329
    %v331 = vpop.f32.mrb[0].mxu0
    %v332 = vadd.f32 0.0, %v331
    %v333 = vpop.f32.mrb[0].mxu0
    %v334 = vadd.f32 0.0, %v333
    %335 = vmatprep.mubr.bf16.mxu0 0
    %336 = vmatmul.mubr.bf16.gmra.mrb[0].mxu0 %v198
    %v337 = vpop.f32.mrb[0].mxu0
    %v338 = vadd.f32 0.0, %v337
    %v339 = vpop.f32.mrb[0].mxu0
    %v340 = vadd.f32 0.0, %v339
    %v341 = vpop.f32.mrb[0].mxu0
    %v342 = vadd.f32 0.0, %v341
    %v343 = vpop.f32.mrb[0].mxu0
    %v344 = vadd.f32 0.0, %v343
    %345 = vdwg.mxu0
    %346 = vmatprep.subr.bf16.mxu0 %v156
    %347 = vmatpush1.bf16.msra.mxu0 %v155
    %348 = vmatprep.subr.bf16.mxu0 %v165
    %349 = vmatpush1.bf16.msra.mxu0 %v164
    %350 = vmatprep.subr.bf16.mxu0 0
    %351 = vmatpush1.bf16.msra.mxu0 0
    %352 = vmatprep.subr.bf16.mxu0 0
    %353 = vmatpush1.bf16.msra.mxu0 0
    %354 = vmatprep.subr.bf16.mxu0 0
    %355 = vmatpush1.bf16.msra.mxu0 0
    %356 = vmatprep.subr.bf16.mxu0 0
    %357 = vmatpush1.bf16.msra.mxu0 0
    %358 = vmatprep.subr.bf16.mxu0 0
    %359 = vmatpush1.bf16.msra.mxu0 0
    %360 = vmatprep.subr.bf16.mxu0 0
    %361 = vmatpush1.bf16.msra.mxu0 0
    %362 = vmatprep.subr.bf16.mxu0 0
    %363 = vmatpush1.bf16.msra.mxu0 0
    %364 = vmatprep.subr.bf16.mxu0 0
    %365 = vmatpush1.bf16.msra.mxu0 0
    %366 = vmatprep.subr.bf16.mxu0 0
    %367 = vmatpush1.bf16.msra.mxu0 0
    %368 = vmatprep.subr.bf16.mxu0 0
    %369 = vmatpush1.bf16.msra.mxu0 0
    %370 = vmatprep.subr.bf16.mxu0 0
    %371 = vmatpush1.bf16.msra.mxu0 0
    %372 = vmatprep.subr.bf16.mxu0 0
    %373 = vmatpush1.bf16.msra.mxu0 0
    %374 = vmatprep.subr.bf16.mxu0 0
    %375 = vmatpush1.bf16.msra.mxu0 0
    %376 = vmatprep.subr.bf16.mxu0 0
    %377 = vmatpush1.bf16.msra.mxu0 0
    %378 = vmatprep.mubr.bf16.mxu0 0
    %379 = vmatmul.mubr.bf16.gmra.mrb[0].mxu0 %v189
    %v380 = vpop.f32.mrb[0].mxu0
    %v381 = vadd.f32 0.0, %v380
    %v382 = vpop.f32.mrb[0].mxu0
    %v383 = vadd.f32 0.0, %v382
    %v384 = vpop.f32.mrb[0].mxu0
    %v385 = vadd.f32 0.0, %v384
    %v386 = vpop.f32.mrb[0].mxu0
    %v387 = vadd.f32 0.0, %v386
    %388 = vmatprep.mubr.bf16.mxu0 0
    %389 = vmatmul.mubr.bf16.gmra.mrb[0].mxu0 %v192
    %v390 = vpop.f32.mrb[0].mxu0
    %v391 = vadd.f32 0.0, %v390
    %v392 = vpop.f32.mrb[0].mxu0
    %v393 = vadd.f32 0.0, %v392
    %v394 = vpop.f32.mrb[0].mxu0
    %v395 = vadd.f32 0.0, %v394
    %v396 = vpop.f32.mrb[0].mxu0
    %v397 = vadd.f32 0.0, %v396
    %398 = vmatprep.mubr.bf16.mxu0 0
    %399 = vmatmul.mubr.bf16.gmra.mrb[0].mxu0 %v195
    %v400 = vpop.f32.mrb[0].mxu0
    %v401 = vadd.f32 0.0, %v400
    %v402 = vpop.f32.mrb[0].mxu0
    %v403 = vadd.f32 0.0, %v402
    %v404 = vpop.f32.mrb[0].mxu0
    %v405 = vadd.f32 0.0, %v404
    %v406 = vpop.f32.mrb[0].mxu0
    %v407 = vadd.f32 0.0, %v406
    %408 = vmatprep.mubr.bf16.mxu0 0
    %409 = vmatmul.mubr.bf16.gmra.mrb[0].mxu0 %v198
    %v410 = vpop.f32.mrb[0].mxu0
    %v411 = vadd.f32 0.0, %v410
    %v412 = vpop.f32.mrb[0].mxu0
    %v413 = vadd.f32 0.0, %v412
    %v414 = vpop.f32.mrb[0].mxu0
    %v415 = vadd.f32 0.0, %v414
    %v416 = vpop.f32.mrb[0].mxu0
    %v417 = vadd.f32 0.0, %v416
    %418 = vdwg.mxu0
    %419 = vmatprep.subr.bf16.mxu0 %v158
    %420 = vmatpush1.bf16.msra.mxu0 %v157
    %421 = vmatprep.subr.bf16.mxu0 %v167
    %422 = vmatpush1.bf16.msra.mxu0 %v166
    %423 = vmatprep.subr.bf16.mxu0 0
    %424 = vmatpush1.bf16.msra.mxu0 0
    %425 = vmatprep.subr.bf16.mxu0 0
    %426 = vmatpush1.bf16.msra.mxu0 0
    %427 = vmatprep.subr.bf16.mxu0 0
    %428 = vmatpush1.bf16.msra.mxu0 0
    %429 = vmatprep.subr.bf16.mxu0 0
    %430 = vmatpush1.bf16.msra.mxu0 0
    %431 = vmatprep.subr.bf16.mxu0 0
    %432 = vmatpush1.bf16.msra.mxu0 0
    %433 = vmatprep.subr.bf16.mxu0 0
    %434 = vmatpush1.bf16.msra.mxu0 0
    %435 = vmatprep.subr.bf16.mxu0 0
    %436 = vmatpush1.bf16.msra.mxu0 0
    %437 = vmatprep.subr.bf16.mxu0 0
    %438 = vmatpush1.bf16.msra.mxu0 0
    %439 = vmatprep.subr.bf16.mxu0 0
    %440 = vmatpush1.bf16.msra.mxu0 0
    %441 = vmatprep.subr.bf16.mxu0 0
    %442 = vmatpush1.bf16.msra.mxu0 0
    %443 = vmatprep.subr.bf16.mxu0 0
    %444 = vmatpush1.bf16.msra.mxu0 0
    %445 = vmatprep.subr.bf16.mxu0 0
    %446 = vmatpush1.bf16.msra.mxu0 0
    %447 = vmatprep.subr.bf16.mxu0 0
    %448 = vmatpush1.bf16.msra.mxu0 0
    %449 = vmatprep.subr.bf16.mxu0 0
    %450 = vmatpush1.bf16.msra.mxu0 0
    %451 = vmatprep.mubr.bf16.mxu0 0
    %452 = vmatmul.mubr.bf16.gmra.mrb[0].mxu0 %v189
    %v453 = vpop.f32.mrb[0].mxu0
    %v454 = vadd.f32 0.0, %v453
    %v455 = vpop.f32.mrb[0].mxu0
    %v456 = vadd.f32 0.0, %v455
    %v457 = vpop.f32.mrb[0].mxu0
    %v458 = vadd.f32 0.0, %v457
    %v459 = vpop.f32.mrb[0].mxu0
    %v460 = vadd.f32 0.0, %v459
    %461 = vmatprep.mubr.bf16.mxu0 0
    %462 = vmatmul.mubr.bf16.gmra.mrb[0].mxu0 %v192
    %v463 = vpop.f32.mrb[0].mxu0
    %v464 = vadd.f32 0.0, %v463
    %v465 = vpop.f32.mrb[0].mxu0
    %v466 = vadd.f32 0.0, %v465
    %v467 = vpop.f32.mrb[0].mxu0
    %v468 = vadd.f32 0.0, %v467
    %v469 = vpop.f32.mrb[0].mxu0
    %v470 = vadd.f32 0.0, %v469
    %471 = vmatprep.mubr.bf16.mxu0 0
    %472 = vmatmul.mubr.bf16.gmra.mrb[0].mxu0 %v195
    %v473 = vpop.f32.mrb[0].mxu0
    %v474 = vadd.f32 0.0, %v473
    %v475 = vpop.f32.mrb[0].mxu0
    %v476 = vadd.f32 0.0, %v475
    %v477 = vpop.f32.mrb[0].mxu0
    %v478 = vadd.f32 0.0, %v477
    %v479 = vpop.f32.mrb[0].mxu0
    %v480 = vadd.f32 0.0, %v479
    %481 = vmatprep.mubr.bf16.mxu0 0
    %482 = vmatmul.mubr.bf16.gmra.mrb[0].mxu0 %v198
    %v483 = vpop.f32.mrb[0].mxu0
    %v484 = vadd.f32 0.0, %v483
    %v485 = vpop.f32.mrb[0].mxu0
    %v486 = vadd.f32 0.0, %v485
    %v487 = vpop.f32.mrb[0].mxu0
    %v488 = vadd.f32 0.0, %v487
    %v489 = vpop.f32.mrb[0].mxu0
    %v490 = vadd.f32 0.0, %v489
    %491 = vdwg.mxu0
    %492 = vmatprep.subr.bf16.mxu0 0
    %493 = vmatpush1.bf16.msra.mxu0 %v159
    %494 = vmatprep.subr.bf16.mxu0 0
    %495 = vmatpush1.bf16.msra.mxu0 %v168
    %496 = vmatprep.subr.bf16.mxu0 0
    %497 = vmatpush1.bf16.msra.mxu0 0
    %498 = vmatprep.subr.bf16.mxu0 0
    %499 = vmatpush1.bf16.msra.mxu0 0
    %500 = vmatprep.subr.bf16.mxu0 0
    %501 = vmatpush1.bf16.msra.mxu0 0
    %502 = vmatprep.subr.bf16.mxu0 0
    %503 = vmatpush1.bf16.msra.mxu0 0
    %504 = vmatprep.subr.bf16.mxu0 0
    %505 = vmatpush1.bf16.msra.mxu0 0
    %506 = vmatprep.subr.bf16.mxu0 0
    %507 = vmatpush1.bf16.msra.mxu0 0
    %508 = vmatprep.subr.bf16.mxu0 0
    %509 = vmatpush1.bf16.msra.mxu0 0
    %510 = vmatprep.subr.bf16.mxu0 0
    %511 = vmatpush1.bf16.msra.mxu0 0
    %512 = vmatprep.subr.bf16.mxu0 0
    %513 = vmatpush1.bf16.msra.mxu0 0
    %514 = vmatprep.subr.bf16.mxu0 0
    %515 = vmatpush1.bf16.msra.mxu0 0
    %516 = vmatprep.subr.bf16.mxu0 0
    %517 = vmatpush1.bf16.msra.mxu0 0
    %518 = vmatprep.subr.bf16.mxu0 0
    %519 = vmatpush1.bf16.msra.mxu0 0
    %520 = vmatprep.subr.bf16.mxu0 0
    %521 = vmatpush1.bf16.msra.mxu0 0
    %522 = vmatprep.subr.bf16.mxu0 0
    %523 = vmatpush1.bf16.msra.mxu0 0
    %524 = vmatprep.mubr.bf16.mxu0 0
    %525 = vmatmul.mubr.bf16.gmra.mrb[0].mxu0 %v189
    %v526 = vpop.f32.mrb[0].mxu0
    %v527 = vadd.f32 0.0, %v526
    %v528 = vpop.f32.mrb[0].mxu0
    %v529 = vpop.f32.mrb[0].mxu0
    %v530 = vadd.f32 0.0, %v529
    %v531 = vpop.f32.mrb[0].mxu0
    %532 = vmatprep.mubr.bf16.mxu0 0
    %533 = vmatmul.mubr.bf16.gmra.mrb[0].mxu0 %v192
    %v534 = vpop.f32.mrb[0].mxu0
    %v535 = vadd.f32 0.0, %v534
    %v536 = vpop.f32.mrb[0].mxu0
    %v537 = vpop.f32.mrb[0].mxu0
    %v538 = vadd.f32 0.0, %v537
    %v539 = vpop.f32.mrb[0].mxu0
    %540 = vmatprep.mubr.bf16.mxu0 0
    %541 = vmatmul.mubr.bf16.gmra.mrb[0].mxu0 %v195
    %v542 = vpop.f32.mrb[0].mxu0
    %v543 = vadd.f32 0.0, %v542
    %v544 = vpop.f32.mrb[0].mxu0
    %v545 = vpop.f32.mrb[0].mxu0
    %v546 = vadd.f32 0.0, %v545
    %v547 = vpop.f32.mrb[0].mxu0
    %548 = vmatprep.mubr.bf16.mxu0 0
    %549 = vmatmul.mubr.bf16.gmra.mrb[0].mxu0 %v198
    %v550 = vpop.f32.mrb[0].mxu0
    %v551 = vadd.f32 0.0, %v550
    %v552 = vpop.f32.mrb[0].mxu0
    %v553 = vpop.f32.mrb[0].mxu0
    %v554 = vadd.f32 0.0, %v553
    %v555 = vpop.f32.mrb[0].mxu0
    %556 = vdwg.mxu0
    %v557 = vld [vmem:[#allocation6] sm:$0xff]
    %v558 = vmul.f32 %v63, %v557
    %v559 = vmul.f32 %v64, %v557
    %v560 = vmul.f32 %v65, %v557
    %v561 = vmul.f32 %v66, %v557
    %v562 = vmul.f32 %v67, %v557
    %v563 = vmul.f32 %v68, %v557
    %v564 = vmul.f32 %v69, %v557
    %v565 = vmul.f32 %v70, %v557
    %v566 = vsel %vm187, %v558, 0.0
    %567 = vadd.xlane.f32.xlu0 %v566
    %v568 = vpop.xlane.xlu0 %567
    %v569 = vsel %vm187, %v559, 0.0
    %570 = vadd.xlane.f32.xlu0 %v569
    %v571 = vpop.xlane.xlu0 %570
    %v572 = vsel %vm187, %v560, 0.0
    %573 = vadd.xlane.f32.xlu0 %v572
    %v574 = vpop.xlane.xlu0 %573
    %v575 = vsel %vm187, %v561, 0.0
    %576 = vadd.xlane.f32.xlu0 %v575
    %v577 = vpop.xlane.xlu0 %576
    %v578 = vsel %vm187, %v562, 0.0
    %579 = vadd.xlane.f32.xlu0 %v578
    %v580 = vpop.xlane.xlu0 %579
    %v581 = vsel %vm187, %v563, 0.0
    %582 = vadd.xlane.f32.xlu0 %v581
    %v583 = vpop.xlane.xlu0 %582
    %v584 = vsel %vm187, %v564, 0.0
    %585 = vadd.xlane.f32.xlu0 %v584
    %v586 = vpop.xlane.xlu0 %585
    %v587 = vsel %vm187, %v565, 0.0
    %588 = vadd.xlane.f32.xlu0 %v587
    %v589 = vpop.xlane.xlu0 %588
    %v590 = vrot.slane %v568, 4
    %v591 = vadd.f32 %v568, %v590
    %v592 = vrot.slane %v591, 2
    %v593 = vadd.f32 %v591, %v592
    %v594 = vrot.slane %v593, 1
    %v595 = vadd.f32 %v593, %v594
    %v596 = vrot.slane %v571, 4
    %v597 = vadd.f32 %v571, %v596
    %v598 = vrot.slane %v597, 2
    %v599 = vadd.f32 %v597, %v598
    %v600 = vrot.slane %v599, 1
    %v601 = vadd.f32 %v599, %v600
    %v602 = vrot.slane %v574, 4
    %v603 = vadd.f32 %v574, %v602
    %v604 = vrot.slane %v603, 2
    %v605 = vadd.f32 %v603, %v604
    %v606 = vrot.slane %v605, 1
    %v607 = vadd.f32 %v605, %v606
    %v608 = vrot.slane %v577, 4
    %v609 = vadd.f32 %v577, %v608
    %v610 = vrot.slane %v609, 2
    %v611 = vadd.f32 %v609, %v610
    %v612 = vrot.slane %v611, 1
    %v613 = vadd.f32 %v611, %v612
    %v614 = vrot.slane %v580, 4
    %v615 = vadd.f32 %v580, %v614
    %v616 = vrot.slane %v615, 2
    %v617 = vadd.f32 %v615, %v616
    %v618 = vrot.slane %v617, 1
    %v619 = vadd.f32 %v617, %v618
    %v620 = vrot.slane %v583, 4
    %v621 = vadd.f32 %v583, %v620
    %v622 = vrot.slane %v621, 2
    %v623 = vadd.f32 %v621, %v622
    %v624 = vrot.slane %v623, 1
    %v625 = vadd.f32 %v623, %v624
    %v626 = vrot.slane %v586, 4
    %v627 = vadd.f32 %v586, %v626
    %v628 = vrot.slane %v627, 2
    %v629 = vadd.f32 %v627, %v628
    %v630 = vrot.slane %v629, 1
    %v631 = vadd.f32 %v629, %v630
    %v632 = vrot.slane %v589, 4
    %v633 = vadd.f32 %v589, %v632
    %v634 = vrot.slane %v633, 2
    %v635 = vadd.f32 %v633, %v634
    %v636 = vrot.slane %v635, 1
    %v637 = vadd.f32 %v635, %v636
    %v638 = vld [vmem:[#allocation2] sm:$0x1]
    %s639 = vtos %v638
    %v640 = vstv %s639
    %v641 = vadd.f32 %v595, %v640
    %v642 = vadd.f32 %v601, %v640
    %v643 = vadd.f32 %v607, %v640
    %v644 = vadd.f32 %v613, %v640
    %v645 = vadd.f32 %v619, %v640
    %v646 = vadd.f32 %v625, %v640
    %v647 = vadd.f32 %v631, %v640
    %v648 = vadd.f32 %v637, %v640
    %v649 = vxor.u32 %v641, 2147483648
    %v650 = vxor.u32 %v642, 2147483648
    %v651 = vxor.u32 %v643, 2147483648
    %v652 = vxor.u32 %v644, 2147483648
    %v653 = vxor.u32 %v645, 2147483648
    %v654 = vxor.u32 %v646, 2147483648
    %v655 = vxor.u32 %v647, 2147483648
    %v656 = vxor.u32 %v648, 2147483648
    %v657 = vmul.f32 %v649, 1.442695
    %v658 = vpow.pop %v657
    %v659 = vmul.f32 %v650, 1.442695
    %v660 = vpow.pop %v659
    %v661 = vmul.f32 %v651, 1.442695
    %v662 = vpow.pop %v661
    %v663 = vmul.f32 %v652, 1.442695
    %v664 = vpow.pop %v663
    %v665 = vmul.f32 %v653, 1.442695
    %v666 = vpow.pop %v665
    %v667 = vmul.f32 %v654, 1.442695
    %v668 = vpow.pop %v667
    %v669 = vmul.f32 %v655, 1.442695
    %v670 = vpow.pop %v669
    %v671 = vmul.f32 %v656, 1.442695
    %v672 = vpow.pop %v671
    %v673 = vadd.f32 %v658, 1.0
    %v674 = vadd.f32 %v660, 1.0
    %v675 = vadd.f32 %v662, 1.0
    %v676 = vadd.f32 %v664, 1.0
    %v677 = vadd.f32 %v666, 1.0
    %v678 = vadd.f32 %v668, 1.0
    %v679 = vadd.f32 %v670, 1.0
    %v680 = vadd.f32 %v672, 1.0
    %v681 = vrcp.pop %v673
    %v682 = vmul.f32 1.0, %v681
    %v683 = vrcp.pop %v674
    %v684 = vmul.f32 1.0, %v683
    %v685 = vrcp.pop %v675
    %v686 = vmul.f32 1.0, %v685
    %v687 = vrcp.pop %v676
    %v688 = vmul.f32 1.0, %v687
    %v689 = vrcp.pop %v677
    %v690 = vmul.f32 1.0, %v689
    %v691 = vrcp.pop %v678
    %v692 = vmul.f32 1.0, %v691
    %v693 = vrcp.pop %v679
    %v694 = vmul.f32 1.0, %v693
    %v695 = vrcp.pop %v680
    %v696 = vmul.f32 1.0, %v695
    %v705 = vrot.slane %v237, 1
    %v706 = vrot.slane %v241, 1
    %v707 = vrot.slane %v247, 1
    %v708 = vrot.slane %v251, 1
    %v709 = vrot.slane %v257, 1
    %v710 = vrot.slane %v261, 1
    %v711 = vrot.slane %v267, 1
    %v712 = vrot.slane %v271, 1
    %v721 = vadd.f32 %v235, %v705
    %v722 = vadd.f32 %v239, %v706
    %v723 = vadd.f32 %v245, %v707
    %v724 = vadd.f32 %v249, %v708
    %v725 = vadd.f32 %v255, %v709
    %v726 = vadd.f32 %v259, %v710
    %v727 = vadd.f32 %v265, %v711
    %v728 = vadd.f32 %v269, %v712
    %v729 = vld [vmem:[%s4] sm:$0x1]
    %v730 = vmul.f32 %v721, %v682
    %v731 = vmul.f32 %v722, %v684
    %v732 = vmul.f32 %v723, %v686
    %v733 = vmul.f32 %v724, %v688
    %v734 = vmul.f32 %v725, %v690
    %v735 = vmul.f32 %v726, %v692
    %v736 = vmul.f32 %v727, %v694
    %v737 = vmul.f32 %v728, %v696
    %v739 = vlaneseq
    %v740 = vshrl.u32 %v739, 7
    %v741 = vsub.s32 0, %v740
    %v742 = vrot.slane %v729, %v741
    %v744 = vadd.f32 %v730, %v742
    %v745 = vadd.f32 %v731, %v742
    %v746 = vadd.f32 %v732, %v742
    %v747 = vadd.f32 %v733, %v742
    %v748 = vadd.f32 %v734, %v742
    %v749 = vadd.f32 %v735, %v742
    %v750 = vadd.f32 %v736, %v742
    %v751 = vadd.f32 %v737, %v742
    %v752 = vtanh.pop %v744
    %v753 = vtanh.pop %v745
    %v754 = vtanh.pop %v746
    %v755 = vtanh.pop %v747
    %v756 = vtanh.pop %v748
    %v757 = vtanh.pop %v749
    %v758 = vtanh.pop %v750
    %v759 = vtanh.pop %v751
    %vm760 = vcmask 1046528
    %v761 = vsel %vm760, %v752, -inf
    %v762 = vrot.slane %v761, 4
    %v763 = vmax.f32 %v761, %v762
    %v764 = vrot.slane %v763, 2
    %v765 = vmax.f32 %v763, %v764
    %v766 = vrot.slane %v765, 1
    %v767 = vmax.f32 %v765, %v766
    %v768 = vsel %vm760, %v753, -inf
    %v769 = vrot.slane %v768, 4
    %v770 = vmax.f32 %v768, %v769
    %v771 = vrot.slane %v770, 2
    %v772 = vmax.f32 %v770, %v771
    %v773 = vrot.slane %v772, 1
    %v774 = vmax.f32 %v772, %v773
    %v775 = vsel %vm760, %v754, -inf
    %v776 = vrot.slane %v775, 4
    %v777 = vmax.f32 %v775, %v776
    %v778 = vrot.slane %v777, 2
    %v779 = vmax.f32 %v777, %v778
    %v780 = vrot.slane %v779, 1
    %v781 = vmax.f32 %v779, %v780
    %v782 = vsel %vm760, %v755, -inf
    %v783 = vrot.slane %v782, 4
    %v784 = vmax.f32 %v782, %v783
    %v785 = vrot.slane %v784, 2
    %v786 = vmax.f32 %v784, %v785
    %v787 = vrot.slane %v786, 1
    %v788 = vmax.f32 %v786, %v787
    %v789 = vsel %vm760, %v756, -inf
    %v790 = vrot.slane %v789, 4
    %v791 = vmax.f32 %v789, %v790
    %v792 = vrot.slane %v791, 2
    %v793 = vmax.f32 %v791, %v792
    %v794 = vrot.slane %v793, 1
    %v795 = vmax.f32 %v793, %v794
    %v796 = vsel %vm760, %v757, -inf
    %v797 = vrot.slane %v796, 4
    %v798 = vmax.f32 %v796, %v797
    %v799 = vrot.slane %v798, 2
    %v800 = vmax.f32 %v798, %v799
    %v801 = vrot.slane %v800, 1
    %v802 = vmax.f32 %v800, %v801
    %v803 = vsel %vm760, %v758, -inf
    %v804 = vrot.slane %v803, 4
    %v805 = vmax.f32 %v803, %v804
    %v806 = vrot.slane %v805, 2
    %v807 = vmax.f32 %v805, %v806
    %v808 = vrot.slane %v807, 1
    %v809 = vmax.f32 %v807, %v808
    %v810 = vsel %vm760, %v759, -inf
    %v811 = vrot.slane %v810, 4
    %v812 = vmax.f32 %v810, %v811
    %v813 = vrot.slane %v812, 2
    %v814 = vmax.f32 %v812, %v813
    %v815 = vrot.slane %v814, 1
    %v816 = vmax.f32 %v814, %v815
    %vm825 = vcmask 1041409
    %v826 = vsel %vm825, %v774, %v767
    %vm827 = vcmask 1042434
    %v828 = vsel %vm827, %v781, %v826
    %vm829 = vcmask 1043459
    %v830 = vsel %vm829, %v788, %v828
    %vm831 = vcmask 1044484
    %v832 = vsel %vm831, %v795, %v830
    %vm833 = vcmask 1045509
    %v834 = vsel %vm833, %v802, %v832
    %vm835 = vcmask 1046534
    %v836 = vsel %vm835, %v809, %v834
    %vm837 = vcmask 1047559
    %v838 = vsel %vm837, %v816, %v836
    %840 = vst [vmem:[#allocation9] sm:$0xff] %v838
    %v849 = vrot.slane %v310, 1
    %v850 = vrot.slane %v314, 1
    %v851 = vrot.slane %v320, 1
    %v852 = vrot.slane %v324, 1
    %v853 = vrot.slane %v330, 1
    %v854 = vrot.slane %v334, 1
    %v855 = vrot.slane %v340, 1
    %v856 = vrot.slane %v344, 1
    %v865 = vadd.f32 %v308, %v849
    %v866 = vadd.f32 %v312, %v850
    %v867 = vadd.f32 %v318, %v851
    %v868 = vadd.f32 %v322, %v852
    %v869 = vadd.f32 %v328, %v853
    %v870 = vadd.f32 %v332, %v854
    %v871 = vadd.f32 %v338, %v855
    %v872 = vadd.f32 %v342, %v856
    %v881 = vrot.slane %v381, 2
    %v882 = vrot.slane %v385, 2
    %v883 = vrot.slane %v391, 2
    %v884 = vrot.slane %v395, 2
    %v885 = vrot.slane %v401, 2
    %v886 = vrot.slane %v405, 2
    %v887 = vrot.slane %v411, 2
    %v888 = vrot.slane %v415, 2
    %v897 = vadd.f32 %v865, %v881
    %v898 = vadd.f32 %v866, %v882
    %v899 = vadd.f32 %v867, %v883
    %v900 = vadd.f32 %v868, %v884
    %v901 = vadd.f32 %v869, %v885
    %v902 = vadd.f32 %v870, %v886
    %v903 = vadd.f32 %v871, %v887
    %v904 = vadd.f32 %v872, %v888
    %v905 = vld [vmem:[%s4 + $0x1] sm:$0x1]
    %v906 = vmul.f32 %v897, %v682
    %v907 = vmul.f32 %v898, %v684
    %v908 = vmul.f32 %v899, %v686
    %v909 = vmul.f32 %v900, %v688
    %v910 = vmul.f32 %v901, %v690
    %v911 = vmul.f32 %v902, %v692
    %v912 = vmul.f32 %v903, %v694
    %v913 = vmul.f32 %v904, %v696
    %v915 = vlaneseq
    %v916 = vshrl.u32 %v915, 7
    %v917 = vsub.s32 0, %v916
    %v918 = vrot.slane %v905, %v917
    %v920 = vadd.f32 %v906, %v918
    %v921 = vadd.f32 %v907, %v918
    %v922 = vadd.f32 %v908, %v918
    %v923 = vadd.f32 %v909, %v918
    %v924 = vadd.f32 %v910, %v918
    %v925 = vadd.f32 %v911, %v918
    %v926 = vadd.f32 %v912, %v918
    %v927 = vadd.f32 %v913, %v918
    %v928 = vtanh.pop %v920
    %v929 = vtanh.pop %v921
    %v930 = vtanh.pop %v922
    %v931 = vtanh.pop %v923
    %v932 = vtanh.pop %v924
    %v933 = vtanh.pop %v925
    %v934 = vtanh.pop %v926
    %v935 = vtanh.pop %v927
    %vm936 = vcmask 1045504
    %v937 = vsel %vm936, %v928, -inf
    %v938 = vrot.slane %v937, 4
    %v939 = vmax.f32 %v937, %v938
    %v940 = vrot.slane %v939, 2
    %v941 = vmax.f32 %v939, %v940
    %v942 = vrot.slane %v941, 1
    %v943 = vmax.f32 %v941, %v942
    %v944 = vsel %vm936, %v929, -inf
    %v945 = vrot.slane %v944, 4
    %v946 = vmax.f32 %v944, %v945
    %v947 = vrot.slane %v946, 2
    %v948 = vmax.f32 %v946, %v947
    %v949 = vrot.slane %v948, 1
    %v950 = vmax.f32 %v948, %v949
    %v951 = vsel %vm936, %v930, -inf
    %v952 = vrot.slane %v951, 4
    %v953 = vmax.f32 %v951, %v952
    %v954 = vrot.slane %v953, 2
    %v955 = vmax.f32 %v953, %v954
    %v956 = vrot.slane %v955, 1
    %v957 = vmax.f32 %v955, %v956
    %v958 = vsel %vm936, %v931, -inf
    %v959 = vrot.slane %v958, 4
    %v960 = vmax.f32 %v958, %v959
    %v961 = vrot.slane %v960, 2
    %v962 = vmax.f32 %v960, %v961
    %v963 = vrot.slane %v962, 1
    %v964 = vmax.f32 %v962, %v963
    %v965 = vsel %vm936, %v932, -inf
    %v966 = vrot.slane %v965, 4
    %v967 = vmax.f32 %v965, %v966
    %v968 = vrot.slane %v967, 2
    %v969 = vmax.f32 %v967, %v968
    %v970 = vrot.slane %v969, 1
    %v971 = vmax.f32 %v969, %v970
    %v972 = vsel %vm936, %v933, -inf
    %v973 = vrot.slane %v972, 4
    %v974 = vmax.f32 %v972, %v973
    %v975 = vrot.slane %v974, 2
    %v976 = vmax.f32 %v974, %v975
    %v977 = vrot.slane %v976, 1
    %v978 = vmax.f32 %v976, %v977
    %v979 = vsel %vm936, %v934, -inf
    %v980 = vrot.slane %v979, 4
    %v981 = vmax.f32 %v979, %v980
    %v982 = vrot.slane %v981, 2
    %v983 = vmax.f32 %v981, %v982
    %v984 = vrot.slane %v983, 1
    %v985 = vmax.f32 %v983, %v984
    %v986 = vsel %vm936, %v935, -inf
    %v987 = vrot.slane %v986, 4
    %v988 = vmax.f32 %v986, %v987
    %v989 = vrot.slane %v988, 2
    %v990 = vmax.f32 %v988, %v989
    %v991 = vrot.slane %v990, 1
    %v992 = vmax.f32 %v990, %v991
    %v1001 = vsel %vm825, %v950, %v943
    %v1002 = vsel %vm827, %v957, %v1001
    %v1003 = vsel %vm829, %v964, %v1002
    %v1004 = vsel %vm831, %v971, %v1003
    %v1005 = vsel %vm833, %v978, %v1004
    %v1006 = vsel %vm835, %v985, %v1005
    %v1007 = vsel %vm837, %v992, %v1006
    %1009 = vst [vmem:[#allocation9 + $0x8] sm:$0xff] %v1007
    %v1018 = vrot.slane %v454, 1
    %v1019 = vrot.slane %v458, 1
    %v1020 = vrot.slane %v464, 1
    %v1021 = vrot.slane %v468, 1
    %v1022 = vrot.slane %v474, 1
    %v1023 = vrot.slane %v478, 1
    %v1024 = vrot.slane %v484, 1
    %v1025 = vrot.slane %v488, 1
    %v1034 = vadd.f32 %v383, %v1018
    %v1035 = vadd.f32 %v387, %v1019
    %v1036 = vadd.f32 %v393, %v1020
    %v1037 = vadd.f32 %v397, %v1021
    %v1038 = vadd.f32 %v403, %v1022
    %v1039 = vadd.f32 %v407, %v1023
    %v1040 = vadd.f32 %v413, %v1024
    %v1041 = vadd.f32 %v417, %v1025
    %v1050 = vrot.slane %v456, 2
    %v1051 = vrot.slane %v460, 2
    %v1052 = vrot.slane %v466, 2
    %v1053 = vrot.slane %v470, 2
    %v1054 = vrot.slane %v476, 2
    %v1055 = vrot.slane %v480, 2
    %v1056 = vrot.slane %v486, 2
    %v1057 = vrot.slane %v490, 2
    %v1066 = vadd.f32 %v1034, %v1050
    %v1067 = vadd.f32 %v1035, %v1051
    %v1068 = vadd.f32 %v1036, %v1052
    %v1069 = vadd.f32 %v1037, %v1053
    %v1070 = vadd.f32 %v1038, %v1054
    %v1071 = vadd.f32 %v1039, %v1055
    %v1072 = vadd.f32 %v1040, %v1056
    %v1073 = vadd.f32 %v1041, %v1057
    %v1082 = vrot.slane %v527, 3
    %v1083 = vrot.slane %v530, 3
    %v1084 = vrot.slane %v535, 3
    %v1085 = vrot.slane %v538, 3
    %v1086 = vrot.slane %v543, 3
    %v1087 = vrot.slane %v546, 3
    %v1088 = vrot.slane %v551, 3
    %v1089 = vrot.slane %v554, 3
    %v1098 = vadd.f32 %v1066, %v1082
    %v1099 = vadd.f32 %v1067, %v1083
    %v1100 = vadd.f32 %v1068, %v1084
    %v1101 = vadd.f32 %v1069, %v1085
    %v1102 = vadd.f32 %v1070, %v1086
    %v1103 = vadd.f32 %v1071, %v1087
    %v1104 = vadd.f32 %v1072, %v1088
    %v1105 = vadd.f32 %v1073, %v1089
    %v1106 = vld [vmem:[%s4 + $0x2] sm:$0x1]
    %v1107 = vmul.f32 %v1098, %v682
    %v1108 = vmul.f32 %v1099, %v684
    %v1109 = vmul.f32 %v1100, %v686
    %v1110 = vmul.f32 %v1101, %v688
    %v1111 = vmul.f32 %v1102, %v690
    %v1112 = vmul.f32 %v1103, %v692
    %v1113 = vmul.f32 %v1104, %v694
    %v1114 = vmul.f32 %v1105, %v696
    %v1116 = vlaneseq
    %v1117 = vshrl.u32 %v1116, 7
    %v1118 = vsub.s32 0, %v1117
    %v1119 = vrot.slane %v1106, %v1118
    %v1121 = vadd.f32 %v1107, %v1119
    %v1122 = vadd.f32 %v1108, %v1119
    %v1123 = vadd.f32 %v1109, %v1119
    %v1124 = vadd.f32 %v1110, %v1119
    %v1125 = vadd.f32 %v1111, %v1119
    %v1126 = vadd.f32 %v1112, %v1119
    %v1127 = vadd.f32 %v1113, %v1119
    %v1128 = vadd.f32 %v1114, %v1119
    %v1129 = vtanh.pop %v1121
    %v1130 = vtanh.pop %v1122
    %v1131 = vtanh.pop %v1123
    %v1132 = vtanh.pop %v1124
    %v1133 = vtanh.pop %v1125
    %v1134 = vtanh.pop %v1126
    %v1135 = vtanh.pop %v1127
    %v1136 = vtanh.pop %v1128
    %vm1137 = vcmask 1044480
    %v1138 = vsel %vm1137, %v1129, -inf
    %v1139 = vrot.slane %v1138, 4
    %v1140 = vmax.f32 %v1138, %v1139
    %v1141 = vrot.slane %v1140, 2
    %v1142 = vmax.f32 %v1140, %v1141
    %v1143 = vrot.slane %v1142, 1
    %v1144 = vmax.f32 %v1142, %v1143
    %v1145 = vsel %vm1137, %v1130, -inf
    %v1146 = vrot.slane %v1145, 4
    %v1147 = vmax.f32 %v1145, %v1146
    %v1148 = vrot.slane %v1147, 2
    %v1149 = vmax.f32 %v1147, %v1148
    %v1150 = vrot.slane %v1149, 1
    %v1151 = vmax.f32 %v1149, %v1150
    %v1152 = vsel %vm1137, %v1131, -inf
    %v1153 = vrot.slane %v1152, 4
    %v1154 = vmax.f32 %v1152, %v1153
    %v1155 = vrot.slane %v1154, 2
    %v1156 = vmax.f32 %v1154, %v1155
    %v1157 = vrot.slane %v1156, 1
    %v1158 = vmax.f32 %v1156, %v1157
    %v1159 = vsel %vm1137, %v1132, -inf
    %v1160 = vrot.slane %v1159, 4
    %v1161 = vmax.f32 %v1159, %v1160
    %v1162 = vrot.slane %v1161, 2
    %v1163 = vmax.f32 %v1161, %v1162
    %v1164 = vrot.slane %v1163, 1
    %v1165 = vmax.f32 %v1163, %v1164
    %v1166 = vsel %vm1137, %v1133, -inf
    %v1167 = vrot.slane %v1166, 4
    %v1168 = vmax.f32 %v1166, %v1167
    %v1169 = vrot.slane %v1168, 2
    %v1170 = vmax.f32 %v1168, %v1169
    %v1171 = vrot.slane %v1170, 1
    %v1172 = vmax.f32 %v1170, %v1171
    %v1173 = vsel %vm1137, %v1134, -inf
    %v1174 = vrot.slane %v1173, 4
    %v1175 = vmax.f32 %v1173, %v1174
    %v1176 = vrot.slane %v1175, 2
    %v1177 = vmax.f32 %v1175, %v1176
    %v1178 = vrot.slane %v1177, 1
    %v1179 = vmax.f32 %v1177, %v1178
    %v1180 = vsel %vm1137, %v1135, -inf
    %v1181 = vrot.slane %v1180, 4
    %v1182 = vmax.f32 %v1180, %v1181
    %v1183 = vrot.slane %v1182, 2
    %v1184 = vmax.f32 %v1182, %v1183
    %v1185 = vrot.slane %v1184, 1
    %v1186 = vmax.f32 %v1184, %v1185
    %v1187 = vsel %vm1137, %v1136, -inf
    %v1188 = vrot.slane %v1187, 4
    %v1189 = vmax.f32 %v1187, %v1188
    %v1190 = vrot.slane %v1189, 2
    %v1191 = vmax.f32 %v1189, %v1190
    %v1192 = vrot.slane %v1191, 1
    %v1193 = vmax.f32 %v1191, %v1192
    %v1202 = vsel %vm825, %v1151, %v1144
    %v1203 = vsel %vm827, %v1158, %v1202
    %v1204 = vsel %vm829, %v1165, %v1203
    %v1205 = vsel %vm831, %v1172, %v1204
    %v1206 = vsel %vm833, %v1179, %v1205
    %v1207 = vsel %vm835, %v1186, %v1206
    %v1208 = vsel %vm837, %v1193, %v1207
    %1210 = vst [vmem:[#allocation9 + $0x10] sm:$0xff] %v1208
    // Predicated region
    $region34: #{tpu_custom_call.1} parent=1 // pred_check
      _
    $region35: #{tpu_custom_call.1} parent=1 // pred_check_branch
      %1212 = sbr.rel (0) target = $region37
    $region36: #{tpu_custom_call.1} parent=1 // pred_region
      %s1214 = ssub.s32 384, 384
      %1215 = vsyncadd [#allocation5], %s1214
      %s1217 = sshll.u32 [#allocation9], 4
      %s1218 = int_to_ptr.vmem [resolvable:$true] %s1217
      %1220 = dma.vmem_to_hbm [thread:$0]  %s1218, 384, %s5, [#allocation5]
    $region37: #{tpu_custom_call.1} parent=1 // pred_fallthru
      _
    // Predicated region
    $region38: #{tpu_custom_call.1} parent=1 // pred_check
      _
    $region39: #{tpu_custom_call.1} parent=1 // pred_check_branch
      %1222 = sbr.rel (0) target = $region41
    $region40: #{tpu_custom_call.1} parent=1 // pred_region
      %1223 = dma.done [#allocation5], 384
    $region41: #{tpu_custom_call.1} parent=1 // pred_fallthru
      _
    %1224 = vsyncpa [#allocation4], 1
    %1225 = vsyncpa [#allocation7], 1
    %1226 = vsyncpa [#allocation5], 1

</llo_original>
